<compile_context>
chip_gen: v7x
topology: tpu7x:2x2x1
jax: 0.10.0
libtpu: 0.0.40
codegen_flags: <defaults>
</compile_context>

<pallas_src>
import jax
import jax.numpy as jnp
from jax.experimental import pallas as pl
from jax.experimental.pallas import tpu as pltpu

D_MODEL = 32
KERNEL_SIZE = 3
PADDING = 1
LN_EPS = 1e-5
PACK = 4                      # tokens packed per 128-lane row (4 * 32 = 128 lanes)
MAX_ROW_TILE = 2048           # packed rows per grid step (= 8192 tokens)
OPERAND_DTYPE = jnp.bfloat16  # conv matmul operand dtype (accumulation is f32)


def _round_up(x, m):
    return ((x + m - 1) // m) * m


def _make_kernel(shift, k_taps):
    """Build the kernel body, closed over the static per-tap packed-row shift."""

    def kernel(x_ref, halo_ref, w_ref, proj_ref, p_ref, o_ref):
        # x_ref   : (tile_r, PACK*D)    bf16 main block of the packed padded input
        # halo_ref: (halo_blk, PACK*D)  bf16 rows immediately after the main block
        # w_ref   : (K*PACK*D, PACK*D)  bf16 block-diagonal folded conv weight
        # proj_ref: (PACK*D, PACK*D)    f32 block-diag per-token 1/D averaging matrix
        # p_ref   : (3, PACK*D)         f32 rows = [conv bias; LN gamma; LN beta]
        # o_ref   : (tile_r, PACK*D)    output
        main = x_ref[...]
        halo = halo_ref[...]
        tile_r = main.shape[0]
        full = jnp.concatenate([main, halo], axis=0)      # (tile_r + halo_blk, 128)

        # Conv taps: tap k = packed rows shifted by k*shift (static VMEM slices,
        # no extra HBM traffic), then one lane-concat -> (tile_r, K*128).
        taps = [main] + [full[k * shift:k * shift + tile_r, :]
                         for k in range(1, k_taps)]
        x_cat = jnp.concatenate(taps, axis=-1)

        # Conv1d: all K taps and all PACK packed tokens in a single MXU matmul
        # (bf16 operands, f32 accumulation).
        y = jnp.dot(x_cat, w_ref[...], preferred_element_type=jnp.float32)
        params = p_ref[...]
        y = y + params[0:1, :]                             # conv bias

        # LayerNorm over each token's 32-lane group: segmented mean/var via the
        # block-diagonal averaging matmul (MXU); statistics kept in f32.
        mean = jnp.dot(y, proj_ref[...], preferred_element_type=jnp.float32)
        centered = y - mean
        var = jnp.dot(centered * centered, proj_ref[...],
                      preferred_element_type=jnp.float32)
        inv = jax.lax.rsqrt(var + LN_EPS)
        out = centered * inv * params[1:2, :] + params[2:3, :]

        # ReLU + full 128-lane unmasked store.
        o_ref[...] = jnp.maximum(out, 0.0).astype(o_ref.dtype)

    return kernel


def prepare_conv_module_params(conv_w, conv_b, ln_gamma, ln_beta):
    """Pack conv/LN parameters once (hoisted out of the per-call path).

    conv_w: (D_out, D_in, K) as in nn.Conv1d.weight.
    Returns:
      w_bd   : (K*PACK*D, PACK*D) bf16 block-diag weight.  Input lane layout is
               [tap0 tok0..3 | tap1 tok0..3 | tap2 tok0..3], D lanes per token.
      proj   : (PACK*D, PACK*D)   f32 block-diag 1/D averaging matrix.
      params3: (3, PACK*D)        f32, rows = bias / gamma / beta tiled PACK x.
    """
    d_out, d_in, k_taps = conv_w.shape
    assert d_out == D_MODEL and d_in == D_MODEL
    eye_p = jnp.eye(PACK, dtype=jnp.float32)
    w_taps = jnp.transpose(conv_w, (2, 1, 0)).astype(jnp.float32)   # (K, in, out)
    w_bd = jnp.concatenate(
        [jnp.kron(eye_p, w_taps[k]) for k in range(k_taps)], axis=0
    ).astype(OPERAND_DTYPE)                                         # (K*128, 128)
    proj = jnp.kron(eye_p, jnp.full((D_MODEL, D_MODEL), 1.0 / D_MODEL, jnp.float32))
    params3 = jnp.stack([
        jnp.tile(conv_b.astype(jnp.float32), PACK),
        jnp.tile(ln_gamma.astype(jnp.float32), PACK),
        jnp.tile(ln_beta.astype(jnp.float32), PACK),
    ], axis=0)                                                      # (3, 128)
    return w_bd, proj, params3


def conv_module_forward(x, w_bd, proj, params3):
    """x: (T, B, D) -> (T, B, D).  Conv1d(D,D,3,pad=1) + LayerNorm(D) + ReLU."""
    T, B, D = x.shape
    assert D == D_MODEL
    lanes = PACK * D
    k_taps = w_bd.shape[0] // lanes
    assert k_taps == 2 * PADDING + 1          # "same" conv, output length == T

    # ---- wrapper-side layout: ONE padding pass, all reshapes are free ----
    # The conv tap shift is B tokens; pad batch to a multiple of PACK so the
    # shift is a whole number of packed rows (only copies extra when B % 4 != 0).
    b_pad = _round_up(B, PACK)
    if b_pad != B:
        x = jnp.pad(x, ((0, 0), (0, b_pad - B), (0, 0)))
    n_tok = T * b_pad
    shift = b_pad // PACK                      # packed-row shift per conv tap
    halo_rows = (k_taps - 1) * shift
    halo_blk = max(16, _round_up(halo_rows, 16))   # bf16 sublane tile = 16
    n_rows = n_tok // PACK

    # Tile: as large as possible (<= MAX_ROW_TILE) but split into >= 2 parallel
    # grid steps for non-trivial sizes (v7x has 2 TensorCores); tile_r must be a
    # multiple of halo_blk so the halo BlockSpec lands on a block boundary.
    tile_r = _round_up(pl.cdiv(n_rows, 2), halo_blk)
    tile_r = min(tile_r, max(halo_blk, (MAX_ROW_TILE // halo_blk) * halo_blk))
    rows_pad = _round_up(n_rows, tile_r)
    total_rows = rows_pad + halo_blk           # extra rows cover the last halo

    front = PADDING * b_pad                    # conv left zero-padding (tokens)
    back = total_rows * PACK - front - n_tok   # conv right padding + tile round-up
    x_flat = x.reshape(n_tok, D)
    x_padded = jnp.pad(x_flat, ((front, back), (0, 0))).astype(OPERAND_DTYPE)
    x_packed = x_padded.reshape(total_rows, lanes)   # free row-major reshape

    grid = (rows_pad // tile_r,)
    halo_steps = tile_r // halo_blk

    out_packed = pl.pallas_call(
        _make_kernel(shift, k_taps),
        out_shape=jax.ShapeDtypeStruct((rows_pad, lanes), x.dtype),
        grid_spec=pltpu.PrefetchScalarGridSpec(
            num_scalar_prefetch=0,
            grid=grid,
            in_specs=[
                # main block and halo block are two views of the SAME array:
                pl.BlockSpec((tile_r, lanes), lambda i: (i, 0)),
                pl.BlockSpec((halo_blk, lanes),
                             lambda i: ((i + 1) * halo_steps, 0)),
                pl.BlockSpec((k_taps * lanes, lanes), lambda i: (0, 0)),  # w_bd
                pl.BlockSpec((lanes, lanes), lambda i: (0, 0)),           # proj
                pl.BlockSpec((3, lanes), lambda i: (0, 0)),               # params
            ],
            out_specs=pl.BlockSpec((tile_r, lanes), lambda i: (i, 0)),
        ),
        compiler_params=pltpu.CompilerParams(
            dimension_semantics=("parallel",),
            vmem_limit_bytes=32 * 1024 * 1024),
    )(x_packed, x_packed, w_bd, proj, params3)

    out_flat = out_packed.reshape(rows_pad * PACK, D)[:n_tok]
    return out_flat.reshape(T, b_pad, D)[:, :B, :]


def conv_module_reference(x, conv_w, conv_b, ln_gamma, ln_beta,
                          operand_dtype=jnp.float32):
    """Pure-JAX reference mirroring the PyTorch module.

    `operand_dtype` lets the test mirror the kernel's bf16 conv operands while
    keeping accumulation and LayerNorm statistics in f32.
    """
    T, B, D = x.shape
    K = conv_w.shape[-1]
    x_pad = jnp.pad(x, ((PADDING, PADDING), (0, 0), (0, 0))).astype(operand_dtype)
    w = conv_w.astype(operand_dtype)
    y = jnp.zeros((T, B, D), jnp.float32)
    for k in range(K):
        # y[t, b, o] += sum_i x_pad[t + k, b, i] * w[o, i, k]
        y = y + jnp.einsum("tbi,oi->tbo", x_pad[k:k + T], w[:, :, k],
                           preferred_element_type=jnp.float32)
    y = y + conv_b.astype(jnp.float32)
    mean = jnp.mean(y, axis=-1, keepdims=True)
    var = jnp.mean((y - mean) ** 2, axis=-1, keepdims=True)
    y = (y - mean) * jax.lax.rsqrt(var + LN_EPS) * ln_gamma + ln_beta
    return jnp.maximum(y, 0.0).astype(x.dtype)


if __name__ == "__main__":
    key = jax.random.PRNGKey(0)
    k_x, k_w, k_b, k_g, k_be = jax.random.split(key, 5)

    T, B, D = 8, 2, D_MODEL   # (seq, batch, d_model)
    x = jax.random.normal(k_x, (T, B, D), dtype=jnp.float32)

    # Deterministic parameter init (shapes match nn.Conv1d(D, D, 3) + nn.LayerNorm(D)).
    fan_in = D * KERNEL_SIZE
    bound = 1.0 / (fan_in ** 0.5)
    conv_w = jax.random.uniform(k_w, (D, D, KERNEL_SIZE), jnp.float32, -bound, bound)
    conv_b = jax.random.uniform(k_b, (D,), jnp.float32, -bound, bound)
    ln_gamma = jnp.ones((D,), jnp.float32) + 0.05 * jax.random.normal(k_g, (D,))
    ln_beta = 0.05 * jax.random.normal(k_be, (D,))

    # Parameter packing is done once, outside the per-call path.
    w_bd, proj, params3 = prepare_conv_module_params(conv_w, conv_b, ln_gamma, ln_beta)

    fwd = jax.jit(conv_module_forward)
    out = jax.block_until_ready(fwd(x, w_bd, proj, params3))

    # Reference with the same bf16 conv operands (f32 accumulation / LN stats);
    # vs. a pure-f32 reference the difference is only bf16 rounding (~1e-2).
    ref = conv_module_reference(x, conv_w, conv_b, ln_gamma, ln_beta,
                                operand_dtype=OPERAND_DTYPE)
    assert out.shape == (T, B, D)
    assert jnp.allclose(out, ref, atol=1e-3, rtol=1e-3), \
        f"max abs diff {jnp.max(jnp.abs(out - ref))}"

    print("KERNEL_OK")
</pallas_src>

<mosaic_0001>
module attributes {stable_mosaic.version = 11 : i64} {
  func.func @kernel(%arg0: i32, %arg1: memref<16x128xbf16, #tpu.memory_space<vmem>>, %arg2: memref<16x128xbf16, #tpu.memory_space<vmem>>, %arg3: memref<384x128xbf16, #tpu.memory_space<vmem>>, %arg4: memref<128x128xf32, #tpu.memory_space<vmem>>, %arg5: memref<3x128xf32, #tpu.memory_space<vmem>>, %arg6: memref<16x128xf32, #tpu.memory_space<vmem>>) attributes {dimension_semantics = [#tpu.dimension_semantics<parallel>], iteration_bounds = array<i64: 1>, scalar_prefetch = 0 : i64, scratch_operands = 0 : i64, tpu.core_type = #tpu.core_type<tc>, window_params = [{transform_indices = @transform_0, window_bounds = array<i64: 16, 128>}, {transform_indices = @transform_1, window_bounds = array<i64: 16, 128>}, {pipeline_mode = #tpu.pipeline_mode<synchronous>, transform_indices = @transform_2, window_bounds = array<i64: 384, 128>}, {pipeline_mode = #tpu.pipeline_mode<synchronous>, transform_indices = @transform_3, window_bounds = array<i64: 128, 128>}, {pipeline_mode = #tpu.pipeline_mode<synchronous>, transform_indices = @transform_4, window_bounds = array<i64: 3, 128>}, {transform_indices = @transform_5, window_bounds = array<i64: 16, 128>}]} {
    %c0 = arith.constant 0 : index
    %c0_0 = arith.constant 0 : index
    %0 = vector.load %arg1[%c0, %c0_0] : memref<16x128xbf16, #tpu.memory_space<vmem>>, vector<16x128xbf16>
    %c0_1 = arith.constant 0 : index
    %c0_2 = arith.constant 0 : index
    %1 = vector.load %arg2[%c0_1, %c0_2] : memref<16x128xbf16, #tpu.memory_space<vmem>>, vector<16x128xbf16>
    %2 = tpu.concatenate %0, %1 in 0 : vector<16x128xbf16>, vector<16x128xbf16> -> vector<32x128xbf16>
    %3 = vector.extract_strided_slice %2 {offsets = [1, 0], sizes = [16, 128], strides = [1, 1]} : vector<32x128xbf16> to vector<16x128xbf16>
    %4 = vector.extract_strided_slice %2 {offsets = [2, 0], sizes = [16, 128], strides = [1, 1]} : vector<32x128xbf16> to vector<16x128xbf16>
    %5 = tpu.concatenate %0, %3, %4 in 1 : vector<16x128xbf16>, vector<16x128xbf16>, vector<16x128xbf16> -> vector<16x384xbf16>
    %c0_3 = arith.constant 0 : index
    %c0_4 = arith.constant 0 : index
    %6 = vector.load %arg3[%c0_3, %c0_4] : memref<384x128xbf16, #tpu.memory_space<vmem>>, vector<384x128xbf16>
    %cst = arith.constant dense<0.000000e+00> : vector<16x128xf32>
    %7 = tpu.matmul %5, %6, %cst {dimension_numbers = #tpu.dot_dimension_numbers<[1], [0], [0], [1], [0, 0, 1, 1], [], []>} : vector<16x384xbf16>, vector<384x128xbf16>, vector<16x128xf32> -> vector<16x128xf32>
    %c0_5 = arith.constant 0 : index
    %c0_6 = arith.constant 0 : index
    %8 = vector.load %arg5[%c0_5, %c0_6] : memref<3x128xf32, #tpu.memory_space<vmem>>, vector<3x128xf32>
    %9 = vector.extract_strided_slice %8 {offsets = [0, 0], sizes = [1, 128], strides = [1, 1]} : vector<3x128xf32> to vector<1x128xf32>
    %10 = vector.broadcast %9 : vector<1x128xf32> to vector<16x128xf32>
    %11 = arith.addf %7, %10 : vector<16x128xf32>
    %c0_7 = arith.constant 0 : index
    %c0_8 = arith.constant 0 : index
    %12 = vector.load %arg4[%c0_7, %c0_8] : memref<128x128xf32, #tpu.memory_space<vmem>>, vector<128x128xf32>
    %cst_9 = arith.constant dense<0.000000e+00> : vector<16x128xf32>
    %13 = tpu.matmul %11, %12, %cst_9 {dimension_numbers = #tpu.dot_dimension_numbers<[1], [0], [0], [1], [0, 0, 1, 1], [], []>} : vector<16x128xf32>, vector<128x128xf32>, vector<16x128xf32> -> vector<16x128xf32>
    %14 = arith.subf %11, %13 : vector<16x128xf32>
    %15 = arith.mulf %14, %14 : vector<16x128xf32>
    %c0_10 = arith.constant 0 : index
    %c0_11 = arith.constant 0 : index
    %16 = vector.load %arg4[%c0_10, %c0_11] : memref<128x128xf32, #tpu.memory_space<vmem>>, vector<128x128xf32>
    %cst_12 = arith.constant dense<0.000000e+00> : vector<16x128xf32>
    %17 = tpu.matmul %15, %16, %cst_12 {dimension_numbers = #tpu.dot_dimension_numbers<[1], [0], [0], [1], [0, 0, 1, 1], [], []>} : vector<16x128xf32>, vector<128x128xf32>, vector<16x128xf32> -> vector<16x128xf32>
    %cst_13 = arith.constant 9.99999974E-6 : f32
    %18 = vector.broadcast %cst_13 : f32 to vector<16x128xf32>
    %19 = arith.addf %17, %18 : vector<16x128xf32>
    %20 = math.rsqrt %19 : vector<16x128xf32>
    %21 = arith.mulf %14, %20 : vector<16x128xf32>
    %22 = vector.extract_strided_slice %8 {offsets = [1, 0], sizes = [1, 128], strides = [1, 1]} : vector<3x128xf32> to vector<1x128xf32>
    %23 = vector.broadcast %22 : vector<1x128xf32> to vector<16x128xf32>
    %24 = arith.mulf %21, %23 : vector<16x128xf32>
    %25 = vector.extract_strided_slice %8 {offsets = [2, 0], sizes = [1, 128], strides = [1, 1]} : vector<3x128xf32> to vector<1x128xf32>
    %26 = vector.broadcast %25 : vector<1x128xf32> to vector<16x128xf32>
    %27 = arith.addf %24, %26 : vector<16x128xf32>
    %cst_14 = arith.constant 0.000000e+00 : f32
    %28 = vector.broadcast %cst_14 : f32 to vector<16x128xf32>
    %29 = arith.maximumf %27, %28 : vector<16x128xf32>
    %c0_15 = arith.constant 0 : index
    %c0_16 = arith.constant 0 : index
    %30 = vector.load %arg6[%c0_15, %c0_16] : memref<16x128xf32, #tpu.memory_space<vmem>>, vector<16x128xf32>
    tpu.vector_store %arg6[%c0_15, %c0_16], %29 {strides = array<i32>} : memref<16x128xf32, #tpu.memory_space<vmem>>, vector<16x128xf32>,
    return
  }
  func.func @transform_0(%arg0: i32) -> (i32, i32) {
    %c0_i32 = arith.constant 0 : i32
    %c0_i32_0 = arith.constant 0 : i32
    return %arg0, %c0_i32 : i32, i32
  }
  func.func @transform_1(%arg0: i32) -> (i32, i32) {
    %c1_i32 = arith.constant 1 : i32
    %0 = arith.addi %arg0, %c1_i32 : i32
    %c1_i32_0 = arith.constant 1 : i32
    %1 = arith.muli %0, %c1_i32_0 : i32
    %c0_i32 = arith.constant 0 : i32
    %c0_i32_1 = arith.constant 0 : i32
    return %1, %c0_i32 : i32, i32
  }
  func.func @transform_2(%arg0: i32) -> (i32, i32) {
    %c0_i32 = arith.constant 0 : i32
    %c0_i32_0 = arith.constant 0 : i32
    %c0_i32_1 = arith.constant 0 : i32
    return %c0_i32, %c0_i32_0 : i32, i32
  }
  func.func @transform_3(%arg0: i32) -> (i32, i32) {
    %c0_i32 = arith.constant 0 : i32
    %c0_i32_0 = arith.constant 0 : i32
    %c0_i32_1 = arith.constant 0 : i32
    return %c0_i32, %c0_i32_0 : i32, i32
  }
  func.func @transform_4(%arg0: i32) -> (i32, i32) {
    %c0_i32 = arith.constant 0 : i32
    %c0_i32_0 = arith.constant 0 : i32
    %c0_i32_1 = arith.constant 0 : i32
    return %c0_i32, %c0_i32_0 : i32, i32
  }
  func.func @transform_5(%arg0: i32) -> (i32, i32) {
    %c0_i32 = arith.constant 0 : i32
    %c0_i32_0 = arith.constant 0 : i32
    return %arg0, %c0_i32 : i32, i32
  }
}

</mosaic_0001>

<llo_original>
// kernel: conv_module_forward.1
$region0: #{conv_module_forward.1}
  #allocation0 [shape = 'u32[]', space=smem, size = 0x4, offset = 0x4, fixed_abs, tag = 'smem constant byte address 0x4 - core index']
  #allocation1 [shape = 'u32[144,128]{1,0:T(1,128)}', space=vmem, size = 0x12000, scoped, tag = 'internal scratch']
  %s0 = inlined_call_operand.vmem [shape: bf16[32,128], index: 0, kind: input, shape index: {}, may-alias: {0,1}]
  %s1 = inlined_call_operand.vmem [shape: bf16[32,128], index: 1, kind: input, shape index: {}, may-alias: {0,1}]
  %s2 = inlined_call_operand.vmem [shape: bf16[384,128], index: 2, kind: input, shape index: {}]
  %s3 = inlined_call_operand.hbm [shape: f32[128,128], index: 3, kind: input, shape index: {}]
  %s4 = inlined_call_operand.vmem [shape: f32[3,128], index: 4, kind: input, shape index: {}]
  %s5 = inlined_call_operand.vmem [shape: f32[16,128], index: 5, kind: output, shape index: {}]
  %s6 = sld [smem:[#allocation0]]
  $region34: #{conv_module_forward.1} parent=0
    _
  %s8 = ssub.s32 1, %s6
  %s9 = scalar_select 0, %s8, %s6
  $region1: #{conv_module_forward.1} parent=0
    #allocation2 [shape = 'u8[65536]{0}', space=vmem, size = 0x10000, scoped, tag = 'input window, operand 3, single buffered']
    #allocation3 [shape = 's32[1]{0}', space=sflag, size = 0x4, scoped, tag = 'scoped memory for conv_module_forward.1']
    %10 = vsyncpa [#allocation3], 0
    // Predicated region
    $region2: #{conv_module_forward.1} parent=1 // pred_check
      _
    $region3: #{conv_module_forward.1} parent=1 // pred_check_branch
      %12 = sbr.rel (0) target = $region5
    $region4: #{conv_module_forward.1} parent=1 // pred_region
      _
    $region5: #{conv_module_forward.1} parent=1 // pred_fallthru
      _
    // Predicated region
    $region6: #{conv_module_forward.1} parent=1 // pred_check
      _
    $region7: #{conv_module_forward.1} parent=1 // pred_check_branch
      %14 = sbr.rel (0) target = $region9
    $region8: #{conv_module_forward.1} parent=1 // pred_region
      %s15 = sadd.s32 0, 1
      %s16 = smul.u32 2, %s15
      %p17 = scmp.lt.s32.totalorder %s16, 3
      %s18 = scalar_select %p17, %s16, 3
      %s19 = smul.addr %s18, 4
      %s20 = scalar_lea.vmem %s1, %s19
      %s21 = sadd.s32 0, 1
      %s22 = smul.u32 2, %s21
    $region9: #{conv_module_forward.1} parent=1 // pred_fallthru
      _
    // Predicated region
    $region10: #{conv_module_forward.1} parent=1 // pred_check
      _
    $region11: #{conv_module_forward.1} parent=1 // pred_check_branch
      %24 = sbr.rel (0) target = $region13
    $region12: #{conv_module_forward.1} parent=1 // pred_region
      _
    $region13: #{conv_module_forward.1} parent=1 // pred_fallthru
      _
    // Predicated region
    $region14: #{conv_module_forward.1} parent=1 // pred_check
      _
    $region15: #{conv_module_forward.1} parent=1 // pred_check_branch
      %26 = sbr.rel (0) target = $region17
    $region16: #{conv_module_forward.1} parent=1 // pred_region
      %s28 = ssub.s32 2048, 2048
      %29 = vsyncadd [#allocation3], %s28
      %s30 = sshll.u32 [#allocation2], 4
      %s31 = int_to_ptr.vmem [resolvable:$true] %s30
      %36 = dma.hbm_to_vmem [thread:$0]  %s3, 2048, %s31, [#allocation3], 128, 128, 8
    $region17: #{conv_module_forward.1} parent=1 // pred_fallthru
      _
    // Predicated region
    $region18: #{conv_module_forward.1} parent=1 // pred_check
      _
    $region19: #{conv_module_forward.1} parent=1 // pred_check_branch
      %38 = sbr.rel (0) target = $region21
    $region20: #{conv_module_forward.1} parent=1 // pred_region
      _
    $region21: #{conv_module_forward.1} parent=1 // pred_fallthru
      _
    // Predicated region
    $region22: #{conv_module_forward.1} parent=1 // pred_check
      _
    $region23: #{conv_module_forward.1} parent=1 // pred_check_branch
      %40 = sbr.rel (0) target = $region25
    $region24: #{conv_module_forward.1} parent=1 // pred_region
      %41 = dma.done [#allocation3], 2048
    $region25: #{conv_module_forward.1} parent=1 // pred_fallthru
      _
    %s42 = sadd.s32 0, 1
    %s43 = smul.u32 2, %s42
    %p44 = scmp.lt.s32.totalorder %s43, 3
    %s45 = scalar_select %p44, %s43, 3
    %s46 = smul.addr %s45, 4
    %s47 = scalar_lea.vmem %s1, %s46
    %s48 = sadd.s32 0, 1
    %s49 = smul.u32 2, %s48
    %p50 = scmp.lt.s32.totalorder %s49, 3
    %s51 = scalar_select %p50, %s49, 3
    %s52 = smul.addr %s51, 4
    %s53 = scalar_lea.vmem %s1, %s52
    %s54 = sadd.s32 0, 1
    %s55 = smul.u32 2, %s54
    %v57 = vld [vmem:[%s0] sm:$0xf]
    %v58 = vld [vmem:[%s0 + $0x4] sm:$0xf]
    %v59 = vld [vmem:[%s53] sm:$0xf]
    %v60 = vld [vmem:[%s53 + $0x4] sm:$0xf]
    %v63 = vunpack.c.l.b16 %v57
    %v64 = vunpack.c.l.b16 %v58
    %v65 = vpack.c.b16 %v64, %v63
    %v68 = vunpack.c.l.b16 %v59
    %v69 = vunpack.c.l.b16 %v60
    %v70 = vpack.c.b16 %v69, %v68
    %vm72 = vsmask.f32 7424
    %v74 = vshrl.u32 %v65, 16
    %v76 = vshll.u32 %v65, 16
    %v78 = vrot.slane %v76, 1
    %v79 = vor.u32 %v74, %v78
    %v81 = vshll.u32 %v70, 16
    %v83 = vrot.slane %v81, 1
    %v84 = vsel %vm72, %v79, %v83
    %vm86 = vcmask 1046528
    %v87 = vrot.slane %v65, 1
    %v88 = vrot.slane %v70, 1
    %v89 = vsel %vm86, %v87, %v88
    %v91 = vld [vmem:[%s2] sm:$0xf]
    %v92 = vld [vmem:[%s2 + $0x4] sm:$0xf]
    %v93 = vld [vmem:[%s2 + $0x8] sm:$0xf]
    %v94 = vld [vmem:[%s2 + $0xc] sm:$0xf]
    %v95 = vld [vmem:[%s2 + $0x10] sm:$0xf]
    %v96 = vld [vmem:[%s2 + $0x14] sm:$0xf]
    %v97 = vld [vmem:[%s2 + $0x18] sm:$0xf]
    %v98 = vld [vmem:[%s2 + $0x1c] sm:$0xf]
    %v99 = vld [vmem:[%s2 + $0x20] sm:$0xf]
    %v100 = vld [vmem:[%s2 + $0x24] sm:$0xf]
    %v101 = vld [vmem:[%s2 + $0x28] sm:$0xf]
    %v102 = vld [vmem:[%s2 + $0x2c] sm:$0xf]
    %v103 = vld [vmem:[%s2 + $0x30] sm:$0xf]
    %v104 = vld [vmem:[%s2 + $0x34] sm:$0xf]
    %v105 = vld [vmem:[%s2 + $0x38] sm:$0xf]
    %v106 = vld [vmem:[%s2 + $0x3c] sm:$0xf]
    %v107 = vld [vmem:[%s2 + $0x40] sm:$0xf]
    %v108 = vld [vmem:[%s2 + $0x44] sm:$0xf]
    %v109 = vld [vmem:[%s2 + $0x48] sm:$0xf]
    %v110 = vld [vmem:[%s2 + $0x4c] sm:$0xf]
    %v111 = vld [vmem:[%s2 + $0x50] sm:$0xf]
    %v112 = vld [vmem:[%s2 + $0x54] sm:$0xf]
    %v113 = vld [vmem:[%s2 + $0x58] sm:$0xf]
    %v114 = vld [vmem:[%s2 + $0x5c] sm:$0xf]
    %v115 = vld [vmem:[%s2 + $0x60] sm:$0xf]
    %v116 = vld [vmem:[%s2 + $0x64] sm:$0xf]
    %v117 = vld [vmem:[%s2 + $0x68] sm:$0xf]
    %v118 = vld [vmem:[%s2 + $0x6c] sm:$0xf]
    %v119 = vld [vmem:[%s2 + $0x70] sm:$0xf]
    %v120 = vld [vmem:[%s2 + $0x74] sm:$0xf]
    %v121 = vld [vmem:[%s2 + $0x78] sm:$0xf]
    %v122 = vld [vmem:[%s2 + $0x7c] sm:$0xf]
    %v123 = vld [vmem:[%s2 + $0x80] sm:$0xf]
    %v124 = vld [vmem:[%s2 + $0x84] sm:$0xf]
    %v125 = vld [vmem:[%s2 + $0x88] sm:$0xf]
    %v126 = vld [vmem:[%s2 + $0x8c] sm:$0xf]
    %v127 = vld [vmem:[%s2 + $0x90] sm:$0xf]
    %v128 = vld [vmem:[%s2 + $0x94] sm:$0xf]
    %v129 = vld [vmem:[%s2 + $0x98] sm:$0xf]
    %v130 = vld [vmem:[%s2 + $0x9c] sm:$0xf]
    %v131 = vld [vmem:[%s2 + $0xa0] sm:$0xf]
    %v132 = vld [vmem:[%s2 + $0xa4] sm:$0xf]
    %v133 = vld [vmem:[%s2 + $0xa8] sm:$0xf]
    %v134 = vld [vmem:[%s2 + $0xac] sm:$0xf]
    %v135 = vld [vmem:[%s2 + $0xb0] sm:$0xf]
    %v136 = vld [vmem:[%s2 + $0xb4] sm:$0xf]
    %v137 = vld [vmem:[%s2 + $0xb8] sm:$0xf]
    %v138 = vld [vmem:[%s2 + $0xbc] sm:$0xf]
    %v139 = vld [vmem:[%s4] sm:$0x7]
    %v140 = vlaneseq
    %v141 = vshrl.u32 %v140, 7
    %v142 = vsub.s32 0, %v141
    %v143 = vrot.slane %v139, %v142
    %v192 = vunpack.c.l.b16 %v91
    %v193 = vunpack.c.l.b16 %v92
    %v194 = vunpack.c.l.b16 %v93
    %v195 = vunpack.c.l.b16 %v94
    %v196 = vunpack.c.l.b16 %v95
    %v197 = vunpack.c.l.b16 %v96
    %v198 = vunpack.c.l.b16 %v97
    %v199 = vunpack.c.l.b16 %v98
    %v200 = vunpack.c.l.b16 %v99
    %v201 = vunpack.c.l.b16 %v100
    %v202 = vunpack.c.l.b16 %v101
    %v203 = vunpack.c.l.b16 %v102
    %v204 = vunpack.c.l.b16 %v103
    %v205 = vunpack.c.l.b16 %v104
    %v206 = vunpack.c.l.b16 %v105
    %v207 = vunpack.c.l.b16 %v106
    %v208 = vunpack.c.l.b16 %v107
    %v209 = vunpack.c.l.b16 %v108
    %v210 = vunpack.c.l.b16 %v109
    %v211 = vunpack.c.l.b16 %v110
    %v212 = vunpack.c.l.b16 %v111
    %v213 = vunpack.c.l.b16 %v112
    %v214 = vunpack.c.l.b16 %v113
    %v215 = vunpack.c.l.b16 %v114
    %v216 = vunpack.c.l.b16 %v115
    %v217 = vunpack.c.l.b16 %v116
    %v218 = vunpack.c.l.b16 %v117
    %v219 = vunpack.c.l.b16 %v118
    %v220 = vunpack.c.l.b16 %v119
    %v221 = vunpack.c.l.b16 %v120
    %v222 = vunpack.c.l.b16 %v121
    %v223 = vunpack.c.l.b16 %v122
    %v224 = vunpack.c.l.b16 %v123
    %v225 = vunpack.c.l.b16 %v124
    %v226 = vunpack.c.l.b16 %v125
    %v227 = vunpack.c.l.b16 %v126
    %v228 = vunpack.c.l.b16 %v127
    %v229 = vunpack.c.l.b16 %v128
    %v230 = vunpack.c.l.b16 %v129
    %v231 = vunpack.c.l.b16 %v130
    %v232 = vunpack.c.l.b16 %v131
    %v233 = vunpack.c.l.b16 %v132
    %v234 = vunpack.c.l.b16 %v133
    %v235 = vunpack.c.l.b16 %v134
    %v236 = vunpack.c.l.b16 %v135
    %v237 = vunpack.c.l.b16 %v136
    %v238 = vunpack.c.l.b16 %v137
    %v239 = vunpack.c.l.b16 %v138
    %v240 = vpack.c.b16 %v193, %v192
    %v241 = vpack.c.b16 %v195, %v194
    %v242 = vpack.c.b16 %v197, %v196
    %v243 = vpack.c.b16 %v199, %v198
    %v244 = vpack.c.b16 %v201, %v200
    %v245 = vpack.c.b16 %v203, %v202
    %v246 = vpack.c.b16 %v205, %v204
    %v247 = vpack.c.b16 %v207, %v206
    %v248 = vpack.c.b16 %v209, %v208
    %v249 = vpack.c.b16 %v211, %v210
    %v250 = vpack.c.b16 %v213, %v212
    %v251 = vpack.c.b16 %v215, %v214
    %v252 = vpack.c.b16 %v217, %v216
    %v253 = vpack.c.b16 %v219, %v218
    %v254 = vpack.c.b16 %v221, %v220
    %v255 = vpack.c.b16 %v223, %v222
    %v256 = vpack.c.b16 %v225, %v224
    %v257 = vpack.c.b16 %v227, %v226
    %v258 = vpack.c.b16 %v229, %v228
    %v259 = vpack.c.b16 %v231, %v230
    %v260 = vpack.c.b16 %v233, %v232
    %v261 = vpack.c.b16 %v235, %v234
    %v262 = vpack.c.b16 %v237, %v236
    %v263 = vpack.c.b16 %v239, %v238
    %288 = vmatprep.subr.bf16.mxu0 0
    %289 = vmatpush1.bf16.msra.mxu0 %v240
    %290 = vmatprep.subr.bf16.mxu0 0
    %291 = vmatpush1.bf16.msra.mxu0 %v241
    %292 = vmatprep.subr.bf16.mxu0 0
    %293 = vmatpush1.bf16.msra.mxu0 %v242
    %294 = vmatprep.subr.bf16.mxu0 0
    %295 = vmatpush1.bf16.msra.mxu0 %v243
    %296 = vmatprep.subr.bf16.mxu0 0
    %297 = vmatpush1.bf16.msra.mxu0 %v244
    %298 = vmatprep.subr.bf16.mxu0 0
    %299 = vmatpush1.bf16.msra.mxu0 %v245
    %300 = vmatprep.subr.bf16.mxu0 0
    %301 = vmatpush1.bf16.msra.mxu0 %v246
    %302 = vmatprep.subr.bf16.mxu0 0
    %303 = vmatpush1.bf16.msra.mxu0 %v247
    %304 = vmatprep.subr.bf16.mxu0 0
    %305 = vmatpush1.bf16.msra.mxu0 %v248
    %306 = vmatprep.subr.bf16.mxu0 0
    %307 = vmatpush1.bf16.msra.mxu0 %v249
    %308 = vmatprep.subr.bf16.mxu0 0
    %309 = vmatpush1.bf16.msra.mxu0 %v250
    %310 = vmatprep.subr.bf16.mxu0 0
    %311 = vmatpush1.bf16.msra.mxu0 %v251
    %312 = vmatprep.subr.bf16.mxu0 0
    %313 = vmatpush1.bf16.msra.mxu0 %v252
    %314 = vmatprep.subr.bf16.mxu0 0
    %315 = vmatpush1.bf16.msra.mxu0 %v253
    %316 = vmatprep.subr.bf16.mxu0 0
    %317 = vmatpush1.bf16.msra.mxu0 %v254
    %318 = vmatprep.subr.bf16.mxu0 0
    %319 = vmatpush1.bf16.msra.mxu0 %v255
    %320 = vmatprep.mubr.bf16.mxu0 %v84
    %321 = vmatmul.mubr.bf16.gmra.mrb[0].mxu0 %v65
    %v322 = vpop.f32.mrb[0].mxu0
    %v323 = vadd.f32 %v143, %v322
    %v324 = vpop.f32.mrb[0].mxu0
    %v325 = vpop.f32.mrb[0].mxu0
    %v326 = vadd.f32 %v143, %v325
    %v327 = vpop.f32.mrb[0].mxu0
    %328 = vdwg.mxu0
    %329 = vmatprep.subr.bf16.mxu0 0
    %330 = vmatpush1.bf16.msra.mxu0 %v256
    %331 = vmatprep.subr.bf16.mxu0 0
    %332 = vmatpush1.bf16.msra.mxu0 %v257
    %333 = vmatprep.subr.bf16.mxu0 0
    %334 = vmatpush1.bf16.msra.mxu0 %v258
    %335 = vmatprep.subr.bf16.mxu0 0
    %336 = vmatpush1.bf16.msra.mxu0 %v259
    %337 = vmatprep.subr.bf16.mxu0 0
    %338 = vmatpush1.bf16.msra.mxu0 %v260
    %339 = vmatprep.subr.bf16.mxu0 0
    %340 = vmatpush1.bf16.msra.mxu0 %v261
    %341 = vmatprep.subr.bf16.mxu0 0
    %342 = vmatpush1.bf16.msra.mxu0 %v262
    %343 = vmatprep.subr.bf16.mxu0 0
    %344 = vmatpush1.bf16.msra.mxu0 %v263
    %345 = vmatprep.subr.bf16.mxu0 0
    %346 = vmatpush1.bf16.msra.mxu0 0
    %347 = vmatprep.subr.bf16.mxu0 0
    %348 = vmatpush1.bf16.msra.mxu0 0
    %349 = vmatprep.subr.bf16.mxu0 0
    %350 = vmatpush1.bf16.msra.mxu0 0
    %351 = vmatprep.subr.bf16.mxu0 0
    %352 = vmatpush1.bf16.msra.mxu0 0
    %353 = vmatprep.subr.bf16.mxu0 0
    %354 = vmatpush1.bf16.msra.mxu0 0
    %355 = vmatprep.subr.bf16.mxu0 0
    %356 = vmatpush1.bf16.msra.mxu0 0
    %357 = vmatprep.subr.bf16.mxu0 0
    %358 = vmatpush1.bf16.msra.mxu0 0
    %359 = vmatprep.subr.bf16.mxu0 0
    %360 = vmatpush1.bf16.msra.mxu0 0
    %361 = vmatprep.mubr.bf16.mxu0 0
    %362 = vmatmul.mubr.bf16.gmra.mrb[0].mxu0 %v89
    %v363 = vpop.f32.mrb[0].mxu0
    %v364 = vadd.f32 %v323, %v363
    %v365 = vpop.f32.mrb[0].mxu0
    %v366 = vpop.f32.mrb[0].mxu0
    %v367 = vadd.f32 %v326, %v366
    %v368 = vpop.f32.mrb[0].mxu0
    %369 = vdwg.mxu0
    %v370 = vld [vmem:[#allocation2] sm:$0xff]
    %v371 = vld [vmem:[#allocation2 + $0x8] sm:$0xff]
    %v372 = vld [vmem:[#allocation2 + $0x10] sm:$0xff]
    %v373 = vld [vmem:[#allocation2 + $0x18] sm:$0xff]
    %v374 = vld [vmem:[#allocation2 + $0x20] sm:$0xff]
    %v375 = vld [vmem:[#allocation2 + $0x28] sm:$0xff]
    %v376 = vld [vmem:[#allocation2 + $0x30] sm:$0xff]
    %v377 = vld [vmem:[#allocation2 + $0x38] sm:$0xff]
    %v378 = vld [vmem:[#allocation2 + $0x40] sm:$0xff]
    %v379 = vld [vmem:[#allocation2 + $0x48] sm:$0xff]
    %v380 = vld [vmem:[#allocation2 + $0x50] sm:$0xff]
    %v381 = vld [vmem:[#allocation2 + $0x58] sm:$0xff]
    %v382 = vld [vmem:[#allocation2 + $0x60] sm:$0xff]
    %v383 = vld [vmem:[#allocation2 + $0x68] sm:$0xff]
    %v384 = vld [vmem:[#allocation2 + $0x70] sm:$0xff]
    %v385 = vld [vmem:[#allocation2 + $0x78] sm:$0xff]
    %386 = vmatprep.subr.mxu0 0.0
    %387 = vmatpush1.msra.mxu0 %v370
    %388 = vmatprep.subr.mxu0 0.0
    %389 = vmatpush1.msra.mxu0 %v371
    %390 = vmatprep.subr.mxu0 0.0
    %391 = vmatpush1.msra.mxu0 %v372
    %392 = vmatprep.subr.mxu0 0.0
    %393 = vmatpush1.msra.mxu0 %v373
    %394 = vmatprep.subr.mxu0 0.0
    %395 = vmatpush1.msra.mxu0 %v374
    %396 = vmatprep.subr.mxu0 0.0
    %397 = vmatpush1.msra.mxu0 %v375
    %398 = vmatprep.subr.mxu0 0.0
    %399 = vmatpush1.msra.mxu0 %v376
    %400 = vmatprep.subr.mxu0 0.0
    %401 = vmatpush1.msra.mxu0 %v377
    %402 = vmatprep.subr.mxu0 0.0
    %403 = vmatpush1.msra.mxu0 %v378
    %404 = vmatprep.subr.mxu0 0.0
    %405 = vmatpush1.msra.mxu0 %v379
    %406 = vmatprep.subr.mxu0 0.0
    %407 = vmatpush1.msra.mxu0 %v380
    %408 = vmatprep.subr.mxu0 0.0
    %409 = vmatpush1.msra.mxu0 %v381
    %410 = vmatprep.subr.mxu0 0.0
    %411 = vmatpush1.msra.mxu0 %v382
    %412 = vmatprep.subr.mxu0 0.0
    %413 = vmatpush1.msra.mxu0 %v383
    %414 = vmatprep.subr.mxu0 0.0
    %415 = vmatpush1.msra.mxu0 %v384
    %416 = vmatprep.subr.mxu0 0.0
    %417 = vmatpush1.msra.mxu0 %v385
    %418 = vmatprep.subr.mxu0 0.0
    %419 = vmatpush1.msra.mxu0 0.0
    %420 = vmatprep.subr.mxu0 0.0
    %421 = vmatpush1.msra.mxu0 0.0
    %422 = vmatprep.subr.mxu0 0.0
    %423 = vmatpush1.msra.mxu0 0.0
    %424 = vmatprep.subr.mxu0 0.0
    %425 = vmatpush1.msra.mxu0 0.0
    %426 = vmatprep.subr.mxu0 0.0
    %427 = vmatpush1.msra.mxu0 0.0
    %428 = vmatprep.subr.mxu0 0.0
    %429 = vmatpush1.msra.mxu0 0.0
    %430 = vmatprep.subr.mxu0 0.0
    %431 = vmatpush1.msra.mxu0 0.0
    %432 = vmatprep.subr.mxu0 0.0
    %433 = vmatpush1.msra.mxu0 0.0
    %434 = vmatprep.subr.mxu0 0.0
    %435 = vmatpush1.msra.mxu0 0.0
    %436 = vmatprep.subr.mxu0 0.0
    %437 = vmatpush1.msra.mxu0 0.0
    %438 = vmatprep.subr.mxu0 0.0
    %439 = vmatpush1.msra.mxu0 0.0
    %440 = vmatprep.subr.mxu0 0.0
    %441 = vmatpush1.msra.mxu0 0.0
    %442 = vmatprep.subr.mxu0 0.0
    %443 = vmatpush1.msra.mxu0 0.0
    %444 = vmatprep.subr.mxu0 0.0
    %445 = vmatpush1.msra.mxu0 0.0
    %446 = vmatprep.subr.mxu0 0.0
    %447 = vmatpush1.msra.mxu0 0.0
    %448 = vmatprep.subr.mxu0 0.0
    %449 = vmatpush1.msra.mxu0 0.0
    %450 = vmatprep.mubr.f32.mxu0 0.0
    %451 = vmatmul.mubr.f32.gmra.mrb[0].mxu0 %v364
    %v452 = vpop.f32.mrb[0].mxu0
    %v453 = vadd.f32 0.0, %v452
    %v454 = vpop.f32.mrb[0].mxu0
    %455 = vmatprep.mubr.f32.mxu0 0.0
    %456 = vmatmul.mubr.f32.gmra.mrb[0].mxu0 %v367
    %v457 = vpop.f32.mrb[0].mxu0
    %v458 = vadd.f32 0.0, %v457
    %v459 = vpop.f32.mrb[0].mxu0
    %460 = vdwg.mxu0
    %v461 = vsub.f32 %v364, %v453
    %v462 = vsub.f32 %v367, %v458
    %v463 = vmul.f32 %v461, %v461
    %v464 = vmul.f32 %v462, %v462
    %465 = vmatprep.subr.mxu0 0.0
    %466 = vmatpush1.msra.mxu0 %v370
    %467 = vmatprep.subr.mxu0 0.0
    %468 = vmatpush1.msra.mxu0 %v371
    %469 = vmatprep.subr.mxu0 0.0
    %470 = vmatpush1.msra.mxu0 %v372
    %471 = vmatprep.subr.mxu0 0.0
    %472 = vmatpush1.msra.mxu0 %v373
    %473 = vmatprep.subr.mxu0 0.0
    %474 = vmatpush1.msra.mxu0 %v374
    %475 = vmatprep.subr.mxu0 0.0
    %476 = vmatpush1.msra.mxu0 %v375
    %477 = vmatprep.subr.mxu0 0.0
    %478 = vmatpush1.msra.mxu0 %v376
    %479 = vmatprep.subr.mxu0 0.0
    %480 = vmatpush1.msra.mxu0 %v377
    %481 = vmatprep.subr.mxu0 0.0
    %482 = vmatpush1.msra.mxu0 %v378
    %483 = vmatprep.subr.mxu0 0.0
    %484 = vmatpush1.msra.mxu0 %v379
    %485 = vmatprep.subr.mxu0 0.0
    %486 = vmatpush1.msra.mxu0 %v380
    %487 = vmatprep.subr.mxu0 0.0
    %488 = vmatpush1.msra.mxu0 %v381
    %489 = vmatprep.subr.mxu0 0.0
    %490 = vmatpush1.msra.mxu0 %v382
    %491 = vmatprep.subr.mxu0 0.0
    %492 = vmatpush1.msra.mxu0 %v383
    %493 = vmatprep.subr.mxu0 0.0
    %494 = vmatpush1.msra.mxu0 %v384
    %495 = vmatprep.subr.mxu0 0.0
    %496 = vmatpush1.msra.mxu0 %v385
    %497 = vmatprep.subr.mxu0 0.0
    %498 = vmatpush1.msra.mxu0 0.0
    %499 = vmatprep.subr.mxu0 0.0
    %500 = vmatpush1.msra.mxu0 0.0
    %501 = vmatprep.subr.mxu0 0.0
    %502 = vmatpush1.msra.mxu0 0.0
    %503 = vmatprep.subr.mxu0 0.0
    %504 = vmatpush1.msra.mxu0 0.0
    %505 = vmatprep.subr.mxu0 0.0
    %506 = vmatpush1.msra.mxu0 0.0
    %507 = vmatprep.subr.mxu0 0.0
    %508 = vmatpush1.msra.mxu0 0.0
    %509 = vmatprep.subr.mxu0 0.0
    %510 = vmatpush1.msra.mxu0 0.0
    %511 = vmatprep.subr.mxu0 0.0
    %512 = vmatpush1.msra.mxu0 0.0
    %513 = vmatprep.subr.mxu0 0.0
    %514 = vmatpush1.msra.mxu0 0.0
    %515 = vmatprep.subr.mxu0 0.0
    %516 = vmatpush1.msra.mxu0 0.0
    %517 = vmatprep.subr.mxu0 0.0
    %518 = vmatpush1.msra.mxu0 0.0
    %519 = vmatprep.subr.mxu0 0.0
    %520 = vmatpush1.msra.mxu0 0.0
    %521 = vmatprep.subr.mxu0 0.0
    %522 = vmatpush1.msra.mxu0 0.0
    %523 = vmatprep.subr.mxu0 0.0
    %524 = vmatpush1.msra.mxu0 0.0
    %525 = vmatprep.subr.mxu0 0.0
    %526 = vmatpush1.msra.mxu0 0.0
    %527 = vmatprep.subr.mxu0 0.0
    %528 = vmatpush1.msra.mxu0 0.0
    %529 = vmatprep.mubr.f32.mxu0 0.0
    %530 = vmatmul.mubr.f32.gmra.mrb[0].mxu0 %v463
    %v531 = vpop.f32.mrb[0].mxu0
    %v532 = vadd.f32 1e-05, %v531
    %v533 = vpop.f32.mrb[0].mxu0
    %534 = vmatprep.mubr.f32.mxu0 0.0
    %535 = vmatmul.mubr.f32.gmra.mrb[0].mxu0 %v464
    %v536 = vpop.f32.mrb[0].mxu0
    %v537 = vadd.f32 1e-05, %v536
    %v538 = vpop.f32.mrb[0].mxu0
    %539 = vdwg.mxu0
    %v540 = vrsqrt.pop %v532
    %v541 = vrsqrt.pop %v537
    %v542 = vmul.f32 %v461, %v540
    %v543 = vmul.f32 %v462, %v541
    %v544 = vlaneseq
    %v545 = vshrl.u32 %v544, 7
    %v546 = vsub.s32 1, %v545
    %v547 = vrot.slane %v139, %v546
    %v548 = vmul.f32 %v542, %v547
    %v549 = vmul.f32 %v543, %v547
    %v550 = vlaneseq
    %v551 = vshrl.u32 %v550, 7
    %v552 = vsub.s32 2, %v551
    %v553 = vrot.slane %v139, %v552
    %v554 = vadd.f32 %v548, %v553
    %v555 = vadd.f32 %v549, %v553
    %v556 = vmax.f32 %v554, 0.0
    %v557 = vmax.f32 %v555, 0.0
    %558 = vst [vmem:[%s5] sm:$0xff] %v556
    %559 = vst [vmem:[%s5 + $0x8] sm:$0xff] %v557
    // Predicated region
    $region26: #{conv_module_forward.1} parent=1 // pred_check
      _
    $region27: #{conv_module_forward.1} parent=1 // pred_check_branch
      %561 = sbr.rel (0) target = $region29
    $region28: #{conv_module_forward.1} parent=1 // pred_region
      _
    $region29: #{conv_module_forward.1} parent=1 // pred_fallthru
      _
    // Predicated region
    $region30: #{conv_module_forward.1} parent=1 // pred_check
      _
    $region31: #{conv_module_forward.1} parent=1 // pred_check_branch
      %563 = sbr.rel (0) target = $region33
    $region32: #{conv_module_forward.1} parent=1 // pred_region
      _
    $region33: #{conv_module_forward.1} parent=1 // pred_fallthru
      _
    %564 = vsyncpa [#allocation3], 1

</llo_original>
